<compile_context>
chip_gen: v7x
topology: tpu7x:2x2x1
jax: 0.10.0
libtpu: 0.0.40
codegen_flags: <defaults>
</compile_context>

<pallas_src>
import functools
import math

import jax
import jax.numpy as jnp
from jax import lax
from jax.experimental import pallas as pl
from jax.experimental.pallas import tpu as pltpu


def _min_c_for_mxu():
    """MXU/VPU crossover for the 1x1 contraction (generation dependent)."""
    try:
        kind = jax.devices()[0].device_kind.lower()
    except Exception:
        kind = ""
    # 128-wide MXU generations (<= v5) pay less K-dim padding -> earlier crossover.
    if any(t in kind for t in ("v2", "v3", "v4", "v5")):
        return 32
    return 64  # v6e / v7x: 256-wide MXU + bf16 casts + result drain -> later crossover


def _pick_tco(cout, cap=512):
    """Output-channel tile: full Cout when small, else a divisor that is a
    multiple of 8 (so the (TCO, C) / (.., TCO, HWp) blocks satisfy (8,128))."""
    if cout <= cap:
        return cout
    for d in range(cap, 7, -1):
        if cout % d == 0 and d % 8 == 0:
            return d
    return cout  # fallback: single (large) block


def _sepconv_kernel(x_ref, m_ref, dw_ref, pw_ref, b_ref, o_ref, acc_ref,
                    *, W, K, C, BB, use_mxu):
    # x_ref  : (1, BB*C, HWp)   BB batch images packed onto sublanes, lane-dense
    # m_ref  : (K*K, HWp)       f32 0/1 border masks (precomputed in wrapper)
    # dw_ref : (BB*C, K*K)      depthwise weights (tiled over the BB packing)
    # pw_ref : (TCO, C)         pointwise 1x1 weights (bf16 on the MXU path)
    # b_ref  : (TCO, 1)         fused bias  (pw @ dw_bias + pw_bias), f32
    # o_ref  : (1, BB, TCO, HWp)
    # acc_ref: (BB*C, HWp) f32  depthwise result, reused across Cout blocks
    off = (K - 1) // 2
    t_center = off * K + off
    HWp = x_ref.shape[-1]

    # ---- depthwise KxK "same" conv: once per batch block, reused for all o ----
    @pl.when(pl.program_id(1) == 0)
    def _():
        x = x_ref[0]                                   # (BB*C, HWp)
        dw = dw_ref[...]                               # (BB*C, K*K)
        mask = m_ref[...]                              # (K*K, HWp)
        acc = x * dw[:, t_center:t_center + 1]         # centre tap: no mask
        for kh in range(K):
            dh = kh - off
            for kw in range(K):
                dwd = kw - off
                if dh == 0 and dwd == 0:
                    continue
                d = dh * W + dwd
                t = kh * K + kw
                # shifted[i] = x[i + d]; wrap-around lanes are always masked off.
                shifted = pltpu.roll(x, (-d) % HWp, 1)
                acc = acc + (shifted * mask[t:t + 1, :]) * dw[:, t:t + 1]
        acc_ref[...] = acc

    acc = acc_ref[...]
    bias = b_ref[...]                                  # (TCO, 1)

    # ---- pointwise 1x1 conv over channels ----
    if use_mxu:
        # BB == 1 on this path.  bf16 inputs, f32 accumulation on the MXU.
        out = jnp.dot(pw_ref[...], acc.astype(pw_ref.dtype),
                      preferred_element_type=jnp.float32)
        o_ref[0, 0] = (out + bias).astype(o_ref.dtype)
    else:
        # Tiny contraction dim: exact-f32 broadcast-MACs on the VPU.
        pw = pw_ref[...]                               # (TCO, C) f32
        for b in range(BB):
            r0 = b * C
            out_b = pw[:, 0:1] * acc[r0:r0 + 1, :] + bias
            for c in range(1, C):
                r = r0 + c
                out_b = out_b + pw[:, c:c + 1] * acc[r:r + 1, :]
            o_ref[0, b] = out_b.astype(o_ref.dtype)


def separable_conv2d(x, dw_w, dw_b, pw_w, pw_b, kernel_size=3, stride=1, dilation=1):
    """x: (B, C, H, W).  Depthwise KxK 'same' conv + pointwise 1x1 conv, both
    with bias (PyTorch SeparableConv2d forward).  Returns (B, Cout, H, W)."""
    # TODO(synk): only stride=1 / dilation=1 / depth_multiplier=1 (the module
    # defaults) are supported here.
    assert stride == 1 and dilation == 1
    B, C, H, W = x.shape
    K = kernel_size
    assert dw_w.shape[0] == C and pw_w.shape[1] == C, "depth_multiplier must be 1"
    Cout = pw_w.shape[0]
    HW = H * W
    HWp = ((HW + 127) // 128) * 128          # lane-dense -> unmasked stores
    off = (K - 1) // 2

    use_mxu = C >= _min_c_for_mxu()
    # Pack BB batch images onto sublanes so BB*C fills the 8 f32 sublanes.
    BB = 1 if (use_mxu or C >= 8) else math.gcd(B, max(1, 8 // C))
    BBC = BB * C

    TCO = _pick_tco(Cout)
    n_co = Cout // TCO

    # ---- wrapper-side prep: metadata-only reshapes + tiny precomputes ----
    x_flat = x.reshape(B, C, HW)
    if HWp != HW:
        x_flat = jnp.pad(x_flat, ((0, 0), (0, 0), (0, HWp - HW)))
    x_pack = x_flat.reshape(B // BB, BBC, HWp)

    dw_w2 = dw_w.reshape(C, K * K).astype(jnp.float32)
    dw_tiled = jnp.tile(dw_w2, (BB, 1))                       # (BB*C, K*K)

    pw_f32 = pw_w.reshape(Cout, C).astype(jnp.float32)
    # Fold the depthwise bias into the pointwise bias (exact, f32):
    #   PW @ (DW(x) + b_dw) + b_pw == PW @ DW(x) + (PW @ b_dw + b_pw)
    fused_b = (pw_f32 @ dw_b.astype(jnp.float32).reshape(C, 1)
               + pw_b.astype(jnp.float32).reshape(Cout, 1))   # (Cout, 1)
    pw_in = pw_f32.astype(jnp.bfloat16) if use_mxu else pw_f32

    # Per-tap border masks (f32 0/1), hoisted out of the kernel's tap loop.
    lane = jnp.arange(HWp, dtype=jnp.int32)
    row, col = lane // W, lane % W
    valid = lane < HW
    masks = []
    for kh in range(K):
        dh = kh - off
        for kw in range(K):
            dwd = kw - off
            ok = (valid & (row + dh >= 0) & (row + dh < H)
                  & (col + dwd >= 0) & (col + dwd < W))
            masks.append(ok)
    mask = jnp.stack(masks).astype(jnp.float32)               # (K*K, HWp)

    # Only raise the scoped-VMEM limit when the default would be tight.
    # TODO(synk): HW-halo spatial tiling for very large images (v7x: 64 MiB VMEM).
    itemsize = jnp.dtype(x.dtype).itemsize
    vmem_est = (2 * BBC * HWp * itemsize            # x block (double-buffered)
                + 2 * BB * TCO * HWp * itemsize     # out block
                + 2 * K * K * HWp * 4               # masks
                + BBC * HWp * 4                     # acc scratch
                + 2 * (TCO * C * jnp.dtype(pw_in.dtype).itemsize + TCO * 4)
                + 2 * BBC * K * K * 4)
    vmem_limit = int(min(100 << 20, vmem_est * 2)) if vmem_est > (24 << 20) else None

    kernel = functools.partial(_sepconv_kernel, W=W, K=K, C=C, BB=BB,
                               use_mxu=use_mxu)
    out = pl.pallas_call(
        kernel,
        out_shape=jax.ShapeDtypeStruct((B // BB, BB, Cout, HWp), x.dtype),
        grid=(B // BB, n_co),
        in_specs=[
            pl.BlockSpec((1, BBC, HWp), lambda b, o: (b, 0, 0)),
            pl.BlockSpec((K * K, HWp), lambda b, o: (0, 0)),
            pl.BlockSpec((BBC, K * K), lambda b, o: (0, 0)),
            pl.BlockSpec((TCO, C), lambda b, o: (o, 0)),
            pl.BlockSpec((TCO, 1), lambda b, o: (o, 0)),
        ],
        out_specs=pl.BlockSpec((1, BB, TCO, HWp), lambda b, o: (b, 0, o, 0)),
        scratch_shapes=[pltpu.VMEM((BBC, HWp), jnp.float32)],
        compiler_params=pltpu.CompilerParams(
            dimension_semantics=("parallel", "arbitrary"),
            vmem_limit_bytes=vmem_limit),
    )(x_pack, mask, dw_tiled, pw_in, fused_b)

    out = out.reshape(B, Cout, HWp)
    if HWp != HW:
        out = out[:, :, :HW]
    return out.reshape(B, Cout, H, W)


def _reference(x, dw_w, dw_b, pw_w, pw_b, K=3):
    B, C, H, W = x.shape
    Cout = pw_w.shape[0]
    pad = K - 1
    lo, hi = pad // 2, pad - pad // 2
    y = lax.conv_general_dilated(
        x, dw_w.reshape(C, 1, K, K), window_strides=(1, 1),
        padding=[(lo, hi), (lo, hi)],
        dimension_numbers=("NCHW", "OIHW", "NCHW"),
        feature_group_count=C,
        precision=lax.Precision.HIGHEST) + dw_b.reshape(1, C, 1, 1)
    z = lax.conv_general_dilated(
        y, pw_w.reshape(Cout, C, 1, 1), window_strides=(1, 1),
        padding="VALID",
        dimension_numbers=("NCHW", "OIHW", "NCHW"),
        precision=lax.Precision.HIGHEST) + pw_b.reshape(1, Cout, 1, 1)
    return z


if __name__ == "__main__":
    B, C_in, H, W = 2, 4, 16, 16
    C_out = 8
    K = 3
    depth_multiplier = 1
    C_mid = C_in * depth_multiplier

    key = jax.random.PRNGKey(0)
    k1, k2, k3, k4, k5 = jax.random.split(key, 5)

    # Deterministic parameter init (kaiming_normal-like stds, as in __init__).
    dw_w = jax.random.normal(k1, (C_mid, 1, K, K), jnp.float32) * math.sqrt(2.0 / (1 * K * K))
    pw_w = jax.random.normal(k2, (C_out, C_mid, 1, 1), jnp.float32) * math.sqrt(2.0 / C_mid)
    dw_b = jax.random.uniform(k3, (C_mid,), jnp.float32, -0.1, 0.1)
    pw_b = jax.random.uniform(k4, (C_out,), jnp.float32, -0.1, 0.1)

    x = jax.random.normal(k5, (B, C_in, H, W), jnp.float32)

    out = separable_conv2d(x, dw_w, dw_b, pw_w, pw_b, kernel_size=K)
    out = jax.block_until_ready(out)

    ref = _reference(x, dw_w, dw_b, pw_w, pw_b, K)
    assert out.shape == (B, C_out, H, W)
    # C=4 < MXU threshold -> exact-f32 VPU pointwise path, tight tolerance is fine.
    # (The bf16 MXU path for large C trades a little accuracy for throughput.)
    assert jnp.allclose(out, ref, atol=1e-4, rtol=1e-4)

    print("KERNEL_OK")
</pallas_src>

<mosaic_0001>
module attributes {stable_mosaic.version = 11 : i64} {
  func.func @_sepconv_kernel(%arg0: i32, %arg1: i32, %arg2: memref<1x8x256xf32, #tpu.memory_space<vmem>>, %arg3: memref<9x256xf32, #tpu.memory_space<vmem>>, %arg4: memref<8x9xf32, #tpu.memory_space<vmem>>, %arg5: memref<8x4xf32, #tpu.memory_space<vmem>>, %arg6: memref<8x1xf32, #tpu.memory_space<vmem>>, %arg7: memref<1x2x8x256xf32, #tpu.memory_space<vmem>>, %arg8: memref<8x256xf32, #tpu.memory_space<vmem>>) attributes {dimension_semantics = [#tpu.dimension_semantics<parallel>, #tpu.dimension_semantics<arbitrary>], iteration_bounds = array<i64: 1, 1>, scalar_prefetch = 0 : i64, scratch_operands = 1 : i64, tpu.core_type = #tpu.core_type<tc>, window_params = [{transform_indices = @transform_0, window_bounds = array<i64: 1, 8, 256>}, {pipeline_mode = #tpu.pipeline_mode<synchronous>, transform_indices = @transform_1, window_bounds = array<i64: 9, 256>}, {pipeline_mode = #tpu.pipeline_mode<synchronous>, transform_indices = @transform_2, window_bounds = array<i64: 8, 9>}, {transform_indices = @transform_3, window_bounds = array<i64: 8, 4>}, {transform_indices = @transform_4, window_bounds = array<i64: 8, 1>}, {transform_indices = @transform_5, window_bounds = array<i64: 1, 2, 8, 256>}]} {
    %c0_i32 = arith.constant 0 : i32
    %0 = arith.cmpi eq, %arg1, %c0_i32 : i32
    %1 = arith.extui %0 : i1 to i32
    %c0_i32_0 = arith.constant 0 : i32
    %2 = arith.cmpi ne, %1, %c0_i32_0 : i32
    scf.if %2 {
      %c0_13 = arith.constant 0 : index
      %c0_14 = arith.constant 0 : index
      %c0_15 = arith.constant 0 : index
      %62 = vector.load %arg2[%c0_13, %c0_14, %c0_15] : memref<1x8x256xf32, #tpu.memory_space<vmem>>, vector<1x8x256xf32>
      %63 = vector.shape_cast %62 : vector<1x8x256xf32> to vector<8x256xf32>
      %c0_16 = arith.constant 0 : index
      %c0_17 = arith.constant 0 : index
      %64 = vector.load %arg4[%c0_16, %c0_17] : memref<8x9xf32, #tpu.memory_space<vmem>>, vector<8x9xf32>
      %c0_18 = arith.constant 0 : index
      %c0_19 = arith.constant 0 : index
      %65 = vector.load %arg3[%c0_18, %c0_19] : memref<9x256xf32, #tpu.memory_space<vmem>>, vector<9x256xf32>
      %66 = vector.extract_strided_slice %64 {offsets = [0, 4], sizes = [8, 1], strides = [1, 1]} : vector<8x9xf32> to vector<8x1xf32>
      %67 = vector.broadcast %66 : vector<8x1xf32> to vector<8x256xf32>
      %68 = arith.mulf %63, %67 : vector<8x256xf32>
      %c17_i32 = arith.constant 17 : i32
      %69 = tpu.dynamic_rotate %63 by %c17_i32 dim 1 : vector<8x256xf32>, i32 -> vector<8x256xf32>
      %70 = vector.extract_strided_slice %65 {offsets = [0, 0], sizes = [1, 256], strides = [1, 1]} : vector<9x256xf32> to vector<1x256xf32>
      %71 = vector.broadcast %70 : vector<1x256xf32> to vector<8x256xf32>
      %72 = arith.mulf %69, %71 : vector<8x256xf32>
      %73 = vector.extract_strided_slice %64 {offsets = [0, 0], sizes = [8, 1], strides = [1, 1]} : vector<8x9xf32> to vector<8x1xf32>
      %74 = vector.broadcast %73 : vector<8x1xf32> to vector<8x256xf32>
      %75 = arith.mulf %72, %74 : vector<8x256xf32>
      %76 = arith.addf %68, %75 : vector<8x256xf32>
      %c16_i32 = arith.constant 16 : i32
      %77 = tpu.dynamic_rotate %63 by %c16_i32 dim 1 : vector<8x256xf32>, i32 -> vector<8x256xf32>
      %78 = vector.extract_strided_slice %65 {offsets = [1, 0], sizes = [1, 256], strides = [1, 1]} : vector<9x256xf32> to vector<1x256xf32>
      %79 = vector.broadcast %78 : vector<1x256xf32> to vector<8x256xf32>
      %80 = arith.mulf %77, %79 : vector<8x256xf32>
      %81 = vector.extract_strided_slice %64 {offsets = [0, 1], sizes = [8, 1], strides = [1, 1]} : vector<8x9xf32> to vector<8x1xf32>
      %82 = vector.broadcast %81 : vector<8x1xf32> to vector<8x256xf32>
      %83 = arith.mulf %80, %82 : vector<8x256xf32>
      %84 = arith.addf %76, %83 : vector<8x256xf32>
      %c15_i32 = arith.constant 15 : i32
      %85 = tpu.dynamic_rotate %63 by %c15_i32 dim 1 : vector<8x256xf32>, i32 -> vector<8x256xf32>
      %86 = vector.extract_strided_slice %65 {offsets = [2, 0], sizes = [1, 256], strides = [1, 1]} : vector<9x256xf32> to vector<1x256xf32>
      %87 = vector.broadcast %86 : vector<1x256xf32> to vector<8x256xf32>
      %88 = arith.mulf %85, %87 : vector<8x256xf32>
      %89 = vector.extract_strided_slice %64 {offsets = [0, 2], sizes = [8, 1], strides = [1, 1]} : vector<8x9xf32> to vector<8x1xf32>
      %90 = vector.broadcast %89 : vector<8x1xf32> to vector<8x256xf32>
      %91 = arith.mulf %88, %90 : vector<8x256xf32>
      %92 = arith.addf %84, %91 : vector<8x256xf32>
      %c1_i32 = arith.constant 1 : i32
      %93 = tpu.dynamic_rotate %63 by %c1_i32 dim 1 : vector<8x256xf32>, i32 -> vector<8x256xf32>
      %94 = vector.extract_strided_slice %65 {offsets = [3, 0], sizes = [1, 256], strides = [1, 1]} : vector<9x256xf32> to vector<1x256xf32>
      %95 = vector.broadcast %94 : vector<1x256xf32> to vector<8x256xf32>
      %96 = arith.mulf %93, %95 : vector<8x256xf32>
      %97 = vector.extract_strided_slice %64 {offsets = [0, 3], sizes = [8, 1], strides = [1, 1]} : vector<8x9xf32> to vector<8x1xf32>
      %98 = vector.broadcast %97 : vector<8x1xf32> to vector<8x256xf32>
      %99 = arith.mulf %96, %98 : vector<8x256xf32>
      %100 = arith.addf %92, %99 : vector<8x256xf32>
      %c255_i32 = arith.constant 255 : i32
      %101 = tpu.dynamic_rotate %63 by %c255_i32 dim 1 : vector<8x256xf32>, i32 -> vector<8x256xf32>
      %102 = vector.extract_strided_slice %65 {offsets = [5, 0], sizes = [1, 256], strides = [1, 1]} : vector<9x256xf32> to vector<1x256xf32>
      %103 = vector.broadcast %102 : vector<1x256xf32> to vector<8x256xf32>
      %104 = arith.mulf %101, %103 : vector<8x256xf32>
      %105 = vector.extract_strided_slice %64 {offsets = [0, 5], sizes = [8, 1], strides = [1, 1]} : vector<8x9xf32> to vector<8x1xf32>
      %106 = vector.broadcast %105 : vector<8x1xf32> to vector<8x256xf32>
      %107 = arith.mulf %104, %106 : vector<8x256xf32>
      %108 = arith.addf %100, %107 : vector<8x256xf32>
      %c241_i32 = arith.constant 241 : i32
      %109 = tpu.dynamic_rotate %63 by %c241_i32 dim 1 : vector<8x256xf32>, i32 -> vector<8x256xf32>
      %110 = vector.extract_strided_slice %65 {offsets = [6, 0], sizes = [1, 256], strides = [1, 1]} : vector<9x256xf32> to vector<1x256xf32>
      %111 = vector.broadcast %110 : vector<1x256xf32> to vector<8x256xf32>
      %112 = arith.mulf %109, %111 : vector<8x256xf32>
      %113 = vector.extract_strided_slice %64 {offsets = [0, 6], sizes = [8, 1], strides = [1, 1]} : vector<8x9xf32> to vector<8x1xf32>
      %114 = vector.broadcast %113 : vector<8x1xf32> to vector<8x256xf32>
      %115 = arith.mulf %112, %114 : vector<8x256xf32>
      %116 = arith.addf %108, %115 : vector<8x256xf32>
      %c240_i32 = arith.constant 240 : i32
      %117 = tpu.dynamic_rotate %63 by %c240_i32 dim 1 : vector<8x256xf32>, i32 -> vector<8x256xf32>
      %118 = vector.extract_strided_slice %65 {offsets = [7, 0], sizes = [1, 256], strides = [1, 1]} : vector<9x256xf32> to vector<1x256xf32>
      %119 = vector.broadcast %118 : vector<1x256xf32> to vector<8x256xf32>
      %120 = arith.mulf %117, %119 : vector<8x256xf32>
      %121 = vector.extract_strided_slice %64 {offsets = [0, 7], sizes = [8, 1], strides = [1, 1]} : vector<8x9xf32> to vector<8x1xf32>
      %122 = vector.broadcast %121 : vector<8x1xf32> to vector<8x256xf32>
      %123 = arith.mulf %120, %122 : vector<8x256xf32>
      %124 = arith.addf %116, %123 : vector<8x256xf32>
      %c239_i32 = arith.constant 239 : i32
      %125 = tpu.dynamic_rotate %63 by %c239_i32 dim 1 : vector<8x256xf32>, i32 -> vector<8x256xf32>
      %126 = vector.extract_strided_slice %65 {offsets = [8, 0], sizes = [1, 256], strides = [1, 1]} : vector<9x256xf32> to vector<1x256xf32>
      %127 = vector.broadcast %126 : vector<1x256xf32> to vector<8x256xf32>
      %128 = arith.mulf %125, %127 : vector<8x256xf32>
      %129 = vector.extract_strided_slice %64 {offsets = [0, 8], sizes = [8, 1], strides = [1, 1]} : vector<8x9xf32> to vector<8x1xf32>
      %130 = vector.broadcast %129 : vector<8x1xf32> to vector<8x256xf32>
      %131 = arith.mulf %128, %130 : vector<8x256xf32>
      %132 = arith.addf %124, %131 : vector<8x256xf32>
      %c0_20 = arith.constant 0 : index
      %c0_21 = arith.constant 0 : index
      %133 = vector.load %arg8[%c0_20, %c0_21] : memref<8x256xf32, #tpu.memory_space<vmem>>, vector<8x256xf32>
      tpu.vector_store %arg8[%c0_20, %c0_21], %132 {strides = array<i32>} : memref<8x256xf32, #tpu.memory_space<vmem>>, vector<8x256xf32>,
    } else {
    }
    %c0 = arith.constant 0 : index
    %c0_1 = arith.constant 0 : index
    %3 = vector.load %arg8[%c0, %c0_1] : memref<8x256xf32, #tpu.memory_space<vmem>>, vector<8x256xf32>
    %c0_2 = arith.constant 0 : index
    %c0_3 = arith.constant 0 : index
    %4 = vector.load %arg6[%c0_2, %c0_3] : memref<8x1xf32, #tpu.memory_space<vmem>>, vector<8x1xf32>
    %c0_4 = arith.constant 0 : index
    %c0_5 = arith.constant 0 : index
    %5 = vector.load %arg5[%c0_4, %c0_5] : memref<8x4xf32, #tpu.memory_space<vmem>>, vector<8x4xf32>
    %6 = vector.extract_strided_slice %5 {offsets = [0, 0], sizes = [8, 1], strides = [1, 1]} : vector<8x4xf32> to vector<8x1xf32>
    %7 = vector.extract_strided_slice %3 {offsets = [0, 0], sizes = [1, 256], strides = [1, 1]} : vector<8x256xf32> to vector<1x256xf32>
    %8 = vector.broadcast %6 : vector<8x1xf32> to vector<8x256xf32>
    %9 = vector.broadcast %7 : vector<1x256xf32> to vector<8x256xf32>
    %10 = arith.mulf %8, %9 : vector<8x256xf32>
    %11 = vector.broadcast %4 : vector<8x1xf32> to vector<8x256xf32>
    %12 = arith.addf %10, %11 : vector<8x256xf32>
    %13 = vector.extract_strided_slice %5 {offsets = [0, 1], sizes = [8, 1], strides = [1, 1]} : vector<8x4xf32> to vector<8x1xf32>
    %14 = vector.extract_strided_slice %3 {offsets = [1, 0], sizes = [1, 256], strides = [1, 1]} : vector<8x256xf32> to vector<1x256xf32>
    %15 = vector.broadcast %13 : vector<8x1xf32> to vector<8x256xf32>
    %16 = vector.broadcast %14 : vector<1x256xf32> to vector<8x256xf32>
    %17 = arith.mulf %15, %16 : vector<8x256xf32>
    %18 = arith.addf %12, %17 : vector<8x256xf32>
    %19 = vector.extract_strided_slice %5 {offsets = [0, 2], sizes = [8, 1], strides = [1, 1]} : vector<8x4xf32> to vector<8x1xf32>
    %20 = vector.extract_strided_slice %3 {offsets = [2, 0], sizes = [1, 256], strides = [1, 1]} : vector<8x256xf32> to vector<1x256xf32>
    %21 = vector.broadcast %19 : vector<8x1xf32> to vector<8x256xf32>
    %22 = vector.broadcast %20 : vector<1x256xf32> to vector<8x256xf32>
    %23 = arith.mulf %21, %22 : vector<8x256xf32>
    %24 = arith.addf %18, %23 : vector<8x256xf32>
    %25 = vector.extract_strided_slice %5 {offsets = [0, 3], sizes = [8, 1], strides = [1, 1]} : vector<8x4xf32> to vector<8x1xf32>
    %26 = vector.extract_strided_slice %3 {offsets = [3, 0], sizes = [1, 256], strides = [1, 1]} : vector<8x256xf32> to vector<1x256xf32>
    %27 = vector.broadcast %25 : vector<8x1xf32> to vector<8x256xf32>
    %28 = vector.broadcast %26 : vector<1x256xf32> to vector<8x256xf32>
    %29 = arith.mulf %27, %28 : vector<8x256xf32>
    %30 = arith.addf %24, %29 : vector<8x256xf32>
    %c0_6 = arith.constant 0 : index
    %c0_7 = arith.constant 0 : index
    %c0_8 = arith.constant 0 : index
    %c0_9 = arith.constant 0 : index
    %31 = vector.load %arg7[%c0_6, %c0_7, %c0_8, %c0_9] : memref<1x2x8x256xf32, #tpu.memory_space<vmem>>, vector<1x1x8x256xf32>
    %32 = vector.shape_cast %31 : vector<1x1x8x256xf32> to vector<8x256xf32>
    %33 = vector.shape_cast %30 : vector<8x256xf32> to vector<1x1x8x256xf32>
    tpu.vector_store %arg7[%c0_6, %c0_7, %c0_8, %c0_9], %33 {strides = array<i32>} : memref<1x2x8x256xf32, #tpu.memory_space<vmem>>, vector<1x1x8x256xf32>,
    %34 = vector.extract_strided_slice %5 {offsets = [0, 0], sizes = [8, 1], strides = [1, 1]} : vector<8x4xf32> to vector<8x1xf32>
    %35 = vector.extract_strided_slice %3 {offsets = [4, 0], sizes = [1, 256], strides = [1, 1]} : vector<8x256xf32> to vector<1x256xf32>
    %36 = vector.broadcast %34 : vector<8x1xf32> to vector<8x256xf32>
    %37 = vector.broadcast %35 : vector<1x256xf32> to vector<8x256xf32>
    %38 = arith.mulf %36, %37 : vector<8x256xf32>
    %39 = vector.broadcast %4 : vector<8x1xf32> to vector<8x256xf32>
    %40 = arith.addf %38, %39 : vector<8x256xf32>
    %41 = vector.extract_strided_slice %5 {offsets = [0, 1], sizes = [8, 1], strides = [1, 1]} : vector<8x4xf32> to vector<8x1xf32>
    %42 = vector.extract_strided_slice %3 {offsets = [5, 0], sizes = [1, 256], strides = [1, 1]} : vector<8x256xf32> to vector<1x256xf32>
    %43 = vector.broadcast %41 : vector<8x1xf32> to vector<8x256xf32>
    %44 = vector.broadcast %42 : vector<1x256xf32> to vector<8x256xf32>
    %45 = arith.mulf %43, %44 : vector<8x256xf32>
    %46 = arith.addf %40, %45 : vector<8x256xf32>
    %47 = vector.extract_strided_slice %5 {offsets = [0, 2], sizes = [8, 1], strides = [1, 1]} : vector<8x4xf32> to vector<8x1xf32>
    %48 = vector.extract_strided_slice %3 {offsets = [6, 0], sizes = [1, 256], strides = [1, 1]} : vector<8x256xf32> to vector<1x256xf32>
    %49 = vector.broadcast %47 : vector<8x1xf32> to vector<8x256xf32>
    %50 = vector.broadcast %48 : vector<1x256xf32> to vector<8x256xf32>
    %51 = arith.mulf %49, %50 : vector<8x256xf32>
    %52 = arith.addf %46, %51 : vector<8x256xf32>
    %53 = vector.extract_strided_slice %5 {offsets = [0, 3], sizes = [8, 1], strides = [1, 1]} : vector<8x4xf32> to vector<8x1xf32>
    %54 = vector.extract_strided_slice %3 {offsets = [7, 0], sizes = [1, 256], strides = [1, 1]} : vector<8x256xf32> to vector<1x256xf32>
    %55 = vector.broadcast %53 : vector<8x1xf32> to vector<8x256xf32>
    %56 = vector.broadcast %54 : vector<1x256xf32> to vector<8x256xf32>
    %57 = arith.mulf %55, %56 : vector<8x256xf32>
    %58 = arith.addf %52, %57 : vector<8x256xf32>
    %c0_10 = arith.constant 0 : index
    %c1 = arith.constant 1 : index
    %c0_11 = arith.constant 0 : index
    %c0_12 = arith.constant 0 : index
    %59 = vector.load %arg7[%c0_10, %c1, %c0_11, %c0_12] : memref<1x2x8x256xf32, #tpu.memory_space<vmem>>, vector<1x1x8x256xf32>
    %60 = vector.shape_cast %59 : vector<1x1x8x256xf32> to vector<8x256xf32>
    %61 = vector.shape_cast %58 : vector<8x256xf32> to vector<1x1x8x256xf32>
    tpu.vector_store %arg7[%c0_10, %c1, %c0_11, %c0_12], %61 {strides = array<i32>} : memref<1x2x8x256xf32, #tpu.memory_space<vmem>>, vector<1x1x8x256xf32>,
    return
  }
  func.func @transform_0(%arg0: i32, %arg1: i32) -> (i32, i32, i32) {
    %c0_i32 = arith.constant 0 : i32
    %c0_i32_0 = arith.constant 0 : i32
    %c0_i32_1 = arith.constant 0 : i32
    return %arg0, %c0_i32, %c0_i32_0 : i32, i32, i32
  }
  func.func @transform_1(%arg0: i32, %arg1: i32) -> (i32, i32) {
    %c0_i32 = arith.constant 0 : i32
    %c0_i32_0 = arith.constant 0 : i32
    %c0_i32_1 = arith.constant 0 : i32
    return %c0_i32, %c0_i32_0 : i32, i32
  }
  func.func @transform_2(%arg0: i32, %arg1: i32) -> (i32, i32) {
    %c0_i32 = arith.constant 0 : i32
    %c0_i32_0 = arith.constant 0 : i32
    %c0_i32_1 = arith.constant 0 : i32
    return %c0_i32, %c0_i32_0 : i32, i32
  }
  func.func @transform_3(%arg0: i32, %arg1: i32) -> (i32, i32) {
    %c0_i32 = arith.constant 0 : i32
    %c0_i32_0 = arith.constant 0 : i32
    return %arg1, %c0_i32 : i32, i32
  }
  func.func @transform_4(%arg0: i32, %arg1: i32) -> (i32, i32) {
    %c0_i32 = arith.constant 0 : i32
    %c0_i32_0 = arith.constant 0 : i32
    return %arg1, %c0_i32 : i32, i32
  }
  func.func @transform_5(%arg0: i32, %arg1: i32) -> (i32, i32, i32, i32) {
    %c0_i32 = arith.constant 0 : i32
    %c0_i32_0 = arith.constant 0 : i32
    %c0_i32_1 = arith.constant 0 : i32
    return %arg0, %c0_i32, %arg1, %c0_i32_0 : i32, i32, i32, i32
  }
}

</mosaic_0001>

<llo_original>
// kernel: tpu_custom_call.1
$region0: #{tpu_custom_call.1}
  #allocation0 [shape = 'u32[]', space=smem, size = 0x4, offset = 0x4, fixed_abs, tag = 'smem constant byte address 0x4 - core index']
  #allocation1 [shape = 'u32[144,128]{1,0:T(1,128)}', space=vmem, size = 0x12000, scoped, tag = 'internal scratch']
  #allocation2 [shape = 'f32[8,256]{1,0:T(8,128)}', space=vmem, size = 0x2000, scoped, tag = 'scratch operand']
  %s0 = inlined_call_operand.vmem [shape: f32[1,8,256], index: 0, kind: input, shape index: {}]
  %s1 = inlined_call_operand.hbm [shape: f32[9,256], index: 1, kind: input, shape index: {}]
  %s2 = inlined_call_operand.vmem [shape: f32[8,9], index: 2, kind: input, shape index: {}]
  %s3 = inlined_call_operand.vmem [shape: f32[8,4], index: 3, kind: input, shape index: {}]
  %s4 = inlined_call_operand.vmem [shape: f32[8,1], index: 4, kind: input, shape index: {}]
  %s5 = inlined_call_operand.hbm [shape: f32[1,2,8,256], index: 5, kind: output, shape index: {}]
  %s6 = sld [smem:[#allocation0]]
  $region38: #{tpu_custom_call.1} parent=0
    _
  %s8 = ssub.s32 1, %s6
  %s9 = scalar_select 0, %s8, %s6
  $region1: #{tpu_custom_call.1} parent=0
    #allocation3 [shape = 'u8[16384]{0}', space=vmem, size = 0x4000, scoped, tag = 'input window, operand 1, single buffered']
    #allocation4 [shape = 's32[1]{0}', space=sflag, size = 0x4, scoped, tag = 'scoped memory for tpu_custom_call.1']
    #allocation5 [shape = 's32[1]{0}', space=sflag, size = 0x4, scoped, tag = 'scoped memory for tpu_custom_call.1']
    #allocation6 [shape = 'u8[16384]{0}', space=vmem, size = 0x4000, scoped, tag = 'output window, operand 0, single buffered']
    %10 = vsyncpa [#allocation4], 0
    %11 = vsyncpa [#allocation5], 0
    // Predicated region
    $region2: #{tpu_custom_call.1} parent=1 // pred_check
      _
    $region3: #{tpu_custom_call.1} parent=1 // pred_check_branch
      %13 = sbr.rel (0) target = $region5
    $region4: #{tpu_custom_call.1} parent=1 // pred_region
      _
    $region5: #{tpu_custom_call.1} parent=1 // pred_fallthru
      _
    // Predicated region
    $region6: #{tpu_custom_call.1} parent=1 // pred_check
      _
    $region7: #{tpu_custom_call.1} parent=1 // pred_check_branch
      %15 = sbr.rel (0) target = $region9
    $region8: #{tpu_custom_call.1} parent=1 // pred_region
      %s17 = ssub.s32 512, 512
      %18 = vsyncadd [#allocation4], %s17
      %s19 = sshll.u32 [#allocation3], 4
      %s20 = int_to_ptr.vmem [resolvable:$true] %s19
      %25 = dma.hbm_to_vmem [thread:$0]  %s1, 512, %s20, [#allocation4], 256, 256, 16
    $region9: #{tpu_custom_call.1} parent=1 // pred_fallthru
      _
    // Predicated region
    $region10: #{tpu_custom_call.1} parent=1 // pred_check
      _
    $region11: #{tpu_custom_call.1} parent=1 // pred_check_branch
      %27 = sbr.rel (0) target = $region13
    $region12: #{tpu_custom_call.1} parent=1 // pred_region
      _
    $region13: #{tpu_custom_call.1} parent=1 // pred_fallthru
      _
    // Predicated region
    $region14: #{tpu_custom_call.1} parent=1 // pred_check
      _
    $region15: #{tpu_custom_call.1} parent=1 // pred_check_branch
      %29 = sbr.rel (0) target = $region17
    $region16: #{tpu_custom_call.1} parent=1 // pred_region
      _
    $region17: #{tpu_custom_call.1} parent=1 // pred_fallthru
      _
    // Predicated region
    $region18: #{tpu_custom_call.1} parent=1 // pred_check
      _
    $region19: #{tpu_custom_call.1} parent=1 // pred_check_branch
      %31 = sbr.rel (0) target = $region21
    $region20: #{tpu_custom_call.1} parent=1 // pred_region
      _
    $region21: #{tpu_custom_call.1} parent=1 // pred_fallthru
      _
    // Predicated region
    $region22: #{tpu_custom_call.1} parent=1 // pred_check
      _
    $region23: #{tpu_custom_call.1} parent=1 // pred_check_branch
      %33 = sbr.rel (0) target = $region25
    $region24: #{tpu_custom_call.1} parent=1 // pred_region
      %34 = dma.done [#allocation4], 512
    $region25: #{tpu_custom_call.1} parent=1 // pred_fallthru
      _
    %p35 = scmp.eq.s32.totalorder 0, 0
    // Predicated region
    $region26: #{tpu_custom_call.1} parent=1 // pred_check
      %p36 = pneg %p35
    $region27: #{tpu_custom_call.1} parent=1 // pred_check_branch
      %38 = sbr.rel (%p36) target = $region29
    $region28: #{tpu_custom_call.1} parent=1 // pred_region
      %v39 = vld [vmem:[%s0] sm:$0xff]
      %v40 = vld [vmem:[%s0 + $0x8] sm:$0xff]
      %v41 = vld [vmem:[%s2] sm:$0xff]
      %v42 = vld [vmem:[#allocation3] sm:$0xff]
      %v43 = vld [vmem:[#allocation3 + $0x8] sm:$0xff]
      %v44 = vld [vmem:[#allocation3 + $0x10] sm:$0x1]
      %v45 = vld [vmem:[#allocation3 + $0x18] sm:$0x1]
      %47 = vset.pattern.permute.xlu0 4
      %48 = vperm.xlu0 %47, %v41
      %v49 = vpop.permute.xlu0 %48
      %v51 = vmul.f32 %v39, %v49
      %v52 = vmul.f32 %v40, %v49
      %53 = vrot.lane.b32.xlu0 %v39, 17
      %v54 = vpop.permute.xlu0 %53
      %55 = vrot.lane.b32.xlu0 %v40, 17
      %v56 = vpop.permute.xlu0 %55
      %v57 = vlaneseq
      %v58 = vand.u32 %v57, 127
      %vm59 = vcmp.lt.s32.totalorder %v58, 17
      %v60 = vsel %vm59, %v54, %v56
      %v61 = vsel %vm59, %v56, %v54
      %v62 = vlaneseq
      %v63 = vshrl.u32 %v62, 7
      %v64 = vsub.s32 0, %v63
      %v65 = vrot.slane %v42, %v64
      %v66 = vlaneseq
      %v67 = vshrl.u32 %v66, 7
      %v68 = vsub.s32 0, %v67
      %v69 = vrot.slane %v43, %v68
      %v70 = vmul.f32 %v61, %v65
      %v71 = vmul.f32 %v60, %v69
      %72 = vset.pattern.permute.xlu0 0
      %73 = vperm.xlu0 %72, %v41
      %v74 = vpop.permute.xlu0 %73
      %v76 = vmul.f32 %v70, %v74
      %v77 = vmul.f32 %v71, %v74
      %v78 = vadd.f32 %v51, %v76
      %v79 = vadd.f32 %v52, %v77
      %80 = vrot.lane.b32.xlu0 %v39, 16
      %v81 = vpop.permute.xlu0 %80
      %82 = vrot.lane.b32.xlu0 %v40, 16
      %v83 = vpop.permute.xlu0 %82
      %vm84 = vcmp.lt.s32.totalorder %v58, 16
      %v85 = vsel %vm84, %v81, %v83
      %v86 = vsel %vm84, %v83, %v81
      %v87 = vlaneseq
      %v88 = vshrl.u32 %v87, 7
      %v89 = vsub.s32 1, %v88
      %v90 = vrot.slane %v42, %v89
      %v91 = vlaneseq
      %v92 = vshrl.u32 %v91, 7
      %v93 = vsub.s32 1, %v92
      %v94 = vrot.slane %v43, %v93
      %v95 = vmul.f32 %v86, %v90
      %v96 = vmul.f32 %v85, %v94
      %97 = vset.pattern.permute.xlu0 1
      %98 = vperm.xlu0 %97, %v41
      %v99 = vpop.permute.xlu0 %98
      %v101 = vmul.f32 %v95, %v99
      %v102 = vmul.f32 %v96, %v99
      %v103 = vadd.f32 %v78, %v101
      %v104 = vadd.f32 %v79, %v102
      %105 = vrot.lane.b32.xlu0 %v39, 15
      %v106 = vpop.permute.xlu0 %105
      %107 = vrot.lane.b32.xlu0 %v40, 15
      %v108 = vpop.permute.xlu0 %107
      %vm109 = vcmp.lt.s32.totalorder %v58, 15
      %v110 = vsel %vm109, %v106, %v108
      %v111 = vsel %vm109, %v108, %v106
      %v112 = vlaneseq
      %v113 = vshrl.u32 %v112, 7
      %v114 = vsub.s32 2, %v113
      %v115 = vrot.slane %v42, %v114
      %v116 = vlaneseq
      %v117 = vshrl.u32 %v116, 7
      %v118 = vsub.s32 2, %v117
      %v119 = vrot.slane %v43, %v118
      %v120 = vmul.f32 %v111, %v115
      %v121 = vmul.f32 %v110, %v119
      %122 = vset.pattern.permute.xlu0 2
      %123 = vperm.xlu0 %122, %v41
      %v124 = vpop.permute.xlu0 %123
      %v126 = vmul.f32 %v120, %v124
      %v127 = vmul.f32 %v121, %v124
      %v128 = vadd.f32 %v103, %v126
      %v129 = vadd.f32 %v104, %v127
      %130 = vrot.lane.b32.xlu0 %v39, 1
      %v131 = vpop.permute.xlu0 %130
      %132 = vrot.lane.b32.xlu0 %v40, 1
      %v133 = vpop.permute.xlu0 %132
      %vm134 = vcmp.lt.s32.totalorder %v58, 1
      %v135 = vsel %vm134, %v131, %v133
      %v136 = vsel %vm134, %v133, %v131
      %v137 = vlaneseq
      %v138 = vshrl.u32 %v137, 7
      %v139 = vsub.s32 3, %v138
      %v140 = vrot.slane %v42, %v139
      %v141 = vlaneseq
      %v142 = vshrl.u32 %v141, 7
      %v143 = vsub.s32 3, %v142
      %v144 = vrot.slane %v43, %v143
      %v145 = vmul.f32 %v136, %v140
      %v146 = vmul.f32 %v135, %v144
      %147 = vset.pattern.permute.xlu0 3
      %148 = vperm.xlu0 %147, %v41
      %v149 = vpop.permute.xlu0 %148
      %v151 = vmul.f32 %v145, %v149
      %v152 = vmul.f32 %v146, %v149
      %v153 = vadd.f32 %v128, %v151
      %v154 = vadd.f32 %v129, %v152
      %155 = vrot.lane.b32.xlu0 %v39, 127
      %v156 = vpop.permute.xlu0 %155
      %157 = vrot.lane.b32.xlu0 %v40, 127
      %v158 = vpop.permute.xlu0 %157
      %vm159 = vcmp.lt.s32.totalorder %v58, 127
      %v160 = vsel %vm159, %v156, %v158
      %v161 = vsel %vm159, %v158, %v156
      %v162 = vlaneseq
      %v163 = vshrl.u32 %v162, 7
      %v164 = vsub.s32 5, %v163
      %v165 = vrot.slane %v42, %v164
      %v166 = vlaneseq
      %v167 = vshrl.u32 %v166, 7
      %v168 = vsub.s32 5, %v167
      %v169 = vrot.slane %v43, %v168
      %v170 = vmul.f32 %v160, %v165
      %v171 = vmul.f32 %v161, %v169
      %172 = vset.pattern.permute.xlu0 5
      %173 = vperm.xlu0 %172, %v41
      %v174 = vpop.permute.xlu0 %173
      %v176 = vmul.f32 %v170, %v174
      %v177 = vmul.f32 %v171, %v174
      %v178 = vadd.f32 %v153, %v176
      %v179 = vadd.f32 %v154, %v177
      %180 = vrot.lane.b32.xlu0 %v39, 113
      %v181 = vpop.permute.xlu0 %180
      %182 = vrot.lane.b32.xlu0 %v40, 113
      %v183 = vpop.permute.xlu0 %182
      %vm184 = vcmp.lt.s32.totalorder %v58, 113
      %v185 = vsel %vm184, %v181, %v183
      %v186 = vsel %vm184, %v183, %v181
      %v187 = vlaneseq
      %v188 = vshrl.u32 %v187, 7
      %v189 = vsub.s32 6, %v188
      %v190 = vrot.slane %v42, %v189
      %v191 = vlaneseq
      %v192 = vshrl.u32 %v191, 7
      %v193 = vsub.s32 6, %v192
      %v194 = vrot.slane %v43, %v193
      %v195 = vmul.f32 %v185, %v190
      %v196 = vmul.f32 %v186, %v194
      %197 = vset.pattern.permute.xlu0 6
      %198 = vperm.xlu0 %197, %v41
      %v199 = vpop.permute.xlu0 %198
      %v201 = vmul.f32 %v195, %v199
      %v202 = vmul.f32 %v196, %v199
      %v203 = vadd.f32 %v178, %v201
      %v204 = vadd.f32 %v179, %v202
      %205 = vrot.lane.b32.xlu0 %v39, 112
      %v206 = vpop.permute.xlu0 %205
      %207 = vrot.lane.b32.xlu0 %v40, 112
      %v208 = vpop.permute.xlu0 %207
      %vm209 = vcmp.lt.s32.totalorder %v58, 112
      %v210 = vsel %vm209, %v206, %v208
      %v211 = vsel %vm209, %v208, %v206
      %v212 = vlaneseq
      %v213 = vshrl.u32 %v212, 7
      %v214 = vsub.s32 7, %v213
      %v215 = vrot.slane %v42, %v214
      %v216 = vlaneseq
      %v217 = vshrl.u32 %v216, 7
      %v218 = vsub.s32 7, %v217
      %v219 = vrot.slane %v43, %v218
      %v220 = vmul.f32 %v210, %v215
      %v221 = vmul.f32 %v211, %v219
      %222 = vset.pattern.permute.xlu0 7
      %223 = vperm.xlu0 %222, %v41
      %v224 = vpop.permute.xlu0 %223
      %v226 = vmul.f32 %v220, %v224
      %v227 = vmul.f32 %v221, %v224
      %v228 = vadd.f32 %v203, %v226
      %v229 = vadd.f32 %v204, %v227
      %230 = vrot.lane.b32.xlu0 %v39, 111
      %v231 = vpop.permute.xlu0 %230
      %232 = vrot.lane.b32.xlu0 %v40, 111
      %v233 = vpop.permute.xlu0 %232
      %vm234 = vcmp.lt.s32.totalorder %v58, 111
      %v235 = vsel %vm234, %v231, %v233
      %v236 = vsel %vm234, %v233, %v231
      %v237 = vlaneseq
      %v238 = vshrl.u32 %v237, 7
      %v239 = vsub.s32 0, %v238
      %v240 = vrot.slane %v44, %v239
      %v241 = vlaneseq
      %v242 = vshrl.u32 %v241, 7
      %v243 = vsub.s32 0, %v242
      %v244 = vrot.slane %v45, %v243
      %v245 = vmul.f32 %v235, %v240
      %v246 = vmul.f32 %v236, %v244
      %247 = vset.pattern.permute.xlu0 8
      %248 = vperm.xlu0 %247, %v41
      %v249 = vpop.permute.xlu0 %248
      %v251 = vmul.f32 %v245, %v249
      %v252 = vmul.f32 %v246, %v249
      %v253 = vadd.f32 %v228, %v251
      %v254 = vadd.f32 %v229, %v252
      %255 = vst [vmem:[#allocation2] sm:$0xff] %v253
      %256 = vst [vmem:[#allocation2 + $0x8] sm:$0xff] %v254
    $region29: #{tpu_custom_call.1} parent=1 // pred_fallthru
      _
    %v257 = vld [vmem:[#allocation2] sm:$0xff]
    %v258 = vld [vmem:[#allocation2 + $0x8] sm:$0xff]
    %v259 = vld [vmem:[%s4] sm:$0xff]
    %v260 = vld [vmem:[%s3] sm:$0xff]
    %262 = vset.pattern.permute.xlu0 0
    %263 = vperm.xlu0 %262, %v260
    %v264 = vpop.permute.xlu0 %263
    %v266 = vlaneseq
    %v267 = vshrl.u32 %v266, 7
    %v268 = vsub.s32 0, %v267
    %v269 = vrot.slane %v257, %v268
    %v270 = vlaneseq
    %v271 = vshrl.u32 %v270, 7
    %v272 = vsub.s32 0, %v271
    %v273 = vrot.slane %v258, %v272
    %v274 = vmul.f32 %v264, %v269
    %v275 = vmul.f32 %v264, %v273
    %277 = vset.pattern.permute.xlu0 0
    %278 = vperm.xlu0 %277, %v259
    %v279 = vpop.permute.xlu0 %278
    %v281 = vadd.f32 %v274, %v279
    %v282 = vadd.f32 %v275, %v279
    %283 = vset.pattern.permute.xlu0 1
    %284 = vperm.xlu0 %283, %v260
    %v285 = vpop.permute.xlu0 %284
    %v287 = vlaneseq
    %v288 = vshrl.u32 %v287, 7
    %v289 = vsub.s32 1, %v288
    %v290 = vrot.slane %v257, %v289
    %v291 = vlaneseq
    %v292 = vshrl.u32 %v291, 7
    %v293 = vsub.s32 1, %v292
    %v294 = vrot.slane %v258, %v293
    %v295 = vmul.f32 %v285, %v290
    %v296 = vmul.f32 %v285, %v294
    %v297 = vadd.f32 %v281, %v295
    %v298 = vadd.f32 %v282, %v296
    %299 = vset.pattern.permute.xlu0 2
    %300 = vperm.xlu0 %299, %v260
    %v301 = vpop.permute.xlu0 %300
    %v303 = vlaneseq
    %v304 = vshrl.u32 %v303, 7
    %v305 = vsub.s32 2, %v304
    %v306 = vrot.slane %v257, %v305
    %v307 = vlaneseq
    %v308 = vshrl.u32 %v307, 7
    %v309 = vsub.s32 2, %v308
    %v310 = vrot.slane %v258, %v309
    %v311 = vmul.f32 %v301, %v306
    %v312 = vmul.f32 %v301, %v310
    %v313 = vadd.f32 %v297, %v311
    %v314 = vadd.f32 %v298, %v312
    %315 = vset.pattern.permute.xlu0 3
    %316 = vperm.xlu0 %315, %v260
    %v317 = vpop.permute.xlu0 %316
    %v319 = vlaneseq
    %v320 = vshrl.u32 %v319, 7
    %v321 = vsub.s32 3, %v320
    %v322 = vrot.slane %v257, %v321
    %v323 = vlaneseq
    %v324 = vshrl.u32 %v323, 7
    %v325 = vsub.s32 3, %v324
    %v326 = vrot.slane %v258, %v325
    %v327 = vmul.f32 %v317, %v322
    %v328 = vmul.f32 %v317, %v326
    %v329 = vadd.f32 %v313, %v327
    %v330 = vadd.f32 %v314, %v328
    %331 = vst [vmem:[#allocation6] sm:$0xff] %v329
    %332 = vst [vmem:[#allocation6 + $0x8] sm:$0xff] %v330
    %v333 = vlaneseq
    %v334 = vshrl.u32 %v333, 7
    %v335 = vsub.s32 4, %v334
    %v336 = vrot.slane %v257, %v335
    %v337 = vlaneseq
    %v338 = vshrl.u32 %v337, 7
    %v339 = vsub.s32 4, %v338
    %v340 = vrot.slane %v258, %v339
    %v341 = vmul.f32 %v264, %v336
    %v342 = vmul.f32 %v264, %v340
    %v343 = vadd.f32 %v341, %v279
    %v344 = vadd.f32 %v342, %v279
    %v345 = vlaneseq
    %v346 = vshrl.u32 %v345, 7
    %v347 = vsub.s32 5, %v346
    %v348 = vrot.slane %v257, %v347
    %v349 = vlaneseq
    %v350 = vshrl.u32 %v349, 7
    %v351 = vsub.s32 5, %v350
    %v352 = vrot.slane %v258, %v351
    %v353 = vmul.f32 %v285, %v348
    %v354 = vmul.f32 %v285, %v352
    %v355 = vadd.f32 %v343, %v353
    %v356 = vadd.f32 %v344, %v354
    %v357 = vlaneseq
    %v358 = vshrl.u32 %v357, 7
    %v359 = vsub.s32 6, %v358
    %v360 = vrot.slane %v257, %v359
    %v361 = vlaneseq
    %v362 = vshrl.u32 %v361, 7
    %v363 = vsub.s32 6, %v362
    %v364 = vrot.slane %v258, %v363
    %v365 = vmul.f32 %v301, %v360
    %v366 = vmul.f32 %v301, %v364
    %v367 = vadd.f32 %v355, %v365
    %v368 = vadd.f32 %v356, %v366
    %v369 = vlaneseq
    %v370 = vshrl.u32 %v369, 7
    %v371 = vsub.s32 7, %v370
    %v372 = vrot.slane %v257, %v371
    %v373 = vlaneseq
    %v374 = vshrl.u32 %v373, 7
    %v375 = vsub.s32 7, %v374
    %v376 = vrot.slane %v258, %v375
    %v377 = vmul.f32 %v317, %v372
    %v378 = vmul.f32 %v317, %v376
    %v379 = vadd.f32 %v367, %v377
    %v380 = vadd.f32 %v368, %v378
    %s381 = scalar_lea.vmem [#allocation6], 16
    %382 = vst [vmem:[%s381] sm:$0xff] %v379
    %383 = vst [vmem:[%s381 + $0x8] sm:$0xff] %v380
    // Predicated region
    $region30: #{tpu_custom_call.1} parent=1 // pred_check
      _
    $region31: #{tpu_custom_call.1} parent=1 // pred_check_branch
      %385 = sbr.rel (0) target = $region33
    $region32: #{tpu_custom_call.1} parent=1 // pred_region
      %s387 = ssub.s32 512, 512
      %388 = vsyncadd [#allocation5], %s387
      %s389 = sshll.u32 [#allocation6], 4
      %s390 = int_to_ptr.vmem [resolvable:$true] %s389
      %395 = dma.vmem_to_hbm [thread:$0]  %s390, 512, %s5, [#allocation5], 256, 256, 16
    $region33: #{tpu_custom_call.1} parent=1 // pred_fallthru
      _
    // Predicated region
    $region34: #{tpu_custom_call.1} parent=1 // pred_check
      _
    $region35: #{tpu_custom_call.1} parent=1 // pred_check_branch
      %397 = sbr.rel (0) target = $region37
    $region36: #{tpu_custom_call.1} parent=1 // pred_region
      %398 = dma.done [#allocation5], 512
    $region37: #{tpu_custom_call.1} parent=1 // pred_fallthru
      _
    %399 = vsyncpa [#allocation4], 1
    %400 = vsyncpa [#allocation5], 1

</llo_original>
